<compile_context>
chip_gen: v7x
topology: tpu7x:2x2x1
jax: 0.10.0
libtpu: 0.0.40
codegen_flags: <defaults>
</compile_context>

<pallas_src>
import functools

import jax
import jax.numpy as jnp
from jax.experimental import pallas as pl
from jax.experimental.pallas import tpu as pltpu

ACTION_RANGE = 2.5
ACTION_DIM = 1
HIDDEN = 16
_LANES = 128
_SLAB_ROWS = 3 * HIDDEN          # 48 rows (multiple of 8)
_MAX_BLOCK_LANES = 4096          # per-tile VMEM ~ (sd_pad+1)*4096*4*2 ~ 0.5 MiB
_MAX_STATE_DIM = 120             # W1^T must fit lanes 0..126 (lane 127 holds b1)


def _round_up(x, m):
    return -(-x // m) * m


def _choose_block(batch):
    """Pick (block_b, b_pad): minimal lane padding, big tiles, and >= 2
    parallel grid steps when batch > 128 (so v7x's two TensorCores share)."""
    b128 = _round_up(batch, _LANES)
    tiles = b128 // _LANES
    if tiles == 1:
        return _LANES, _LANES
    n_steps = max(2, pl.cdiv(b128, _MAX_BLOCK_LANES))
    block_b = pl.cdiv(tiles, n_steps) * _LANES
    return block_b, n_steps * block_b


def actor_kernel(x_ref, p_ref, out_ref, *, sd_pad, hidden, action_range):
    # x_ref : (sd_pad, TB) transposed state tile (batch on lanes).
    # p_ref : (48, 128) packed parameter slab (constant index_map => resident).
    x = x_ref[...]

    w1 = p_ref[0:hidden, 0:sd_pad]                       # (16, sd_pad)
    b1 = p_ref[0:hidden, _LANES - 1:_LANES]              # (16, 1)
    w2 = p_ref[hidden:2 * hidden, 0:hidden]              # (16, 16)
    b2 = p_ref[hidden:2 * hidden, _LANES - 1:_LANES]     # (16, 1)
    w3 = p_ref[2 * hidden:3 * hidden, 0:1]               # (16, 1) column
    b3 = p_ref[2 * hidden:2 * hidden + 1, 1:2]           # (1, 1)

    # Two hidden layers on the MXU (N = TB lanes -> good utilization), f32 acc.
    h1 = jnp.maximum(jnp.dot(w1, x, preferred_element_type=jnp.float32) + b1, 0.0)
    h2 = jnp.maximum(jnp.dot(w2, h1, preferred_element_type=jnp.float32) + b2, 0.0)

    # Final (hidden -> 1) layer off the MXU: VPU multiply + XLU sublane reduce.
    h3 = jnp.sum(w3 * h2, axis=0, keepdims=True) + b3    # (1, TB), lane-dense
    out_ref[...] = (jnp.tanh(h3) * action_range).astype(out_ref.dtype)


def pack_params(params):
    """Pack (w1,b1,w2,b2,w3,b3) into one zero-padded (48, 128) f32 slab.

    Call ONCE per parameter update (hoisted out of the per-forward path).

    Layout (rows, lanes):
      rows  0:16, lanes 0:state_dim  -> W1^T  (hidden x state_dim)
      rows  0:16, lane 127           -> b1
      rows 16:32, lanes 0:hidden     -> W2^T
      rows 16:32, lane 127           -> b2
      rows 32:48, lane 0             -> W3 as a column (hidden,)
      row  32   , lane 1             -> b3
    """
    w1, b1, w2, b2, w3, b3 = params
    state_dim = w1.shape[0]
    assert state_dim <= _MAX_STATE_DIM, (
        "packed slab layout requires state_dim <= 120 (b1 lives in lane 127)")
    assert w3.shape[1] == 1, "packed layout assumes action_dim == 1"
    slab = jnp.zeros((_SLAB_ROWS, _LANES), jnp.float32)
    slab = slab.at[0:HIDDEN, 0:state_dim].set(w1.T)
    slab = slab.at[0:HIDDEN, _LANES - 1].set(b1[0])
    slab = slab.at[HIDDEN:2 * HIDDEN, 0:HIDDEN].set(w2.T)
    slab = slab.at[HIDDEN:2 * HIDDEN, _LANES - 1].set(b2[0])
    slab = slab.at[2 * HIDDEN:3 * HIDDEN, 0].set(w3[:, 0])
    slab = slab.at[2 * HIDDEN, 1].set(b3[0, 0])
    return slab


@functools.partial(jax.jit, static_argnames=("action_range", "block_b"))
def actor_forward(state, slab, action_range=ACTION_RANGE, block_b=None):
    """Forward pass. `slab` is the pre-packed (48, 128) slab from pack_params()."""
    batch, state_dim = state.shape
    assert state_dim <= _MAX_STATE_DIM, "state_dim must be <= 120 for this kernel"
    sd_pad = _round_up(max(state_dim, 8), 8)

    if block_b is None:
        block_b, b_pad = _choose_block(batch)
    else:
        assert block_b % _LANES == 0
        b_pad = _round_up(batch, block_b)

    # (features, batch) layout so batch is the lane dimension.  Under jit this
    # pad+transpose fuses with the surrounding program; storing states
    # feature-major upstream would remove this extra pass entirely.
    xT = jnp.pad(state.astype(jnp.float32).T,
                 ((0, sd_pad - state_dim), (0, b_pad - batch)))

    out = pl.pallas_call(
        functools.partial(actor_kernel, sd_pad=sd_pad, hidden=HIDDEN,
                          action_range=action_range),
        out_shape=jax.ShapeDtypeStruct((ACTION_DIM, b_pad), jnp.float32),
        grid_spec=pltpu.PrefetchScalarGridSpec(
            num_scalar_prefetch=0,
            grid=(b_pad // block_b,),
            in_specs=[
                pl.BlockSpec((sd_pad, block_b), lambda i: (0, i)),
                pl.BlockSpec((_SLAB_ROWS, _LANES), lambda i: (0, 0)),
            ],
            out_specs=pl.BlockSpec((ACTION_DIM, block_b), lambda i: (0, i)),
        ),
        compiler_params=pltpu.CompilerParams(
            dimension_semantics=("parallel",)),
    )(xT, slab)

    # Back to PyTorch's (batch, action_dim) orientation (padded lanes dropped).
    return out[:, :batch].T


def init_actor_params(key, state_dim, action_dim=ACTION_DIM, hidden=HIDDEN):
    """Deterministic init mimicking nn.Linear default: U(-1/sqrt(fan_in), ...)."""
    keys = jax.random.split(key, 6)

    def linear(kw, kb, fan_in, fan_out):
        bound = 1.0 / jnp.sqrt(fan_in)
        w = jax.random.uniform(kw, (fan_in, fan_out), jnp.float32, -bound, bound)
        b = jax.random.uniform(kb, (1, fan_out), jnp.float32, -bound, bound)
        return w, b

    w1, b1 = linear(keys[0], keys[1], state_dim, hidden)
    w2, b2 = linear(keys[2], keys[3], hidden, hidden)
    w3, b3 = linear(keys[4], keys[5], hidden, action_dim)
    return (w1, b1, w2, b2, w3, b3)


def actor_reference(state, params, action_range=ACTION_RANGE):
    w1, b1, w2, b2, w3, b3 = params
    a = jnp.maximum(state @ w1 + b1, 0.0)
    a = jnp.maximum(a @ w2 + b2, 0.0)
    return jnp.tanh(a @ w3 + b3) * action_range


if __name__ == "__main__":
    key = jax.random.PRNGKey(0)
    k_state, k_params = jax.random.split(key)

    batch, state_dim = 2, 8
    state = jax.random.normal(k_state, (batch, state_dim), dtype=jnp.float32)
    params = init_actor_params(k_params, state_dim)
    slab = pack_params(params)          # packed once, reused across forwards

    out = actor_forward(state, slab)
    out = jax.block_until_ready(out)

    ref = actor_reference(state, params)
    assert out.shape == (batch, ACTION_DIM), out.shape
    assert jnp.allclose(out, ref, atol=1e-4, rtol=1e-4), (out, ref)

    # Quick multi-tile sanity check (>=2 parallel grid steps path).
    batch2 = 300
    state2 = jax.random.normal(k_state, (batch2, state_dim), dtype=jnp.float32)
    out2 = jax.block_until_ready(actor_forward(state2, slab))
    ref2 = actor_reference(state2, params)
    assert out2.shape == (batch2, ACTION_DIM), out2.shape
    assert jnp.allclose(out2, ref2, atol=1e-4, rtol=1e-4)

    print("KERNEL_OK")
</pallas_src>

<mosaic_0001>
module attributes {stable_mosaic.version = 11 : i64} {
  func.func @actor_kernel(%arg0: i32, %arg1: memref<8x128xf32, #tpu.memory_space<vmem>>, %arg2: memref<48x128xf32, #tpu.memory_space<vmem>>, %arg3: memref<1x128xf32, #tpu.memory_space<vmem>>) attributes {dimension_semantics = [#tpu.dimension_semantics<parallel>], iteration_bounds = array<i64: 1>, scalar_prefetch = 0 : i64, scratch_operands = 0 : i64, tpu.core_type = #tpu.core_type<tc>, window_params = [{transform_indices = @transform_0, window_bounds = array<i64: 8, 128>}, {pipeline_mode = #tpu.pipeline_mode<synchronous>, transform_indices = @transform_1, window_bounds = array<i64: 48, 128>}, {transform_indices = @transform_2, window_bounds = array<i64: 1, 128>}]} {
    %c0 = arith.constant 0 : index
    %c0_0 = arith.constant 0 : index
    %0 = vector.load %arg1[%c0, %c0_0] : memref<8x128xf32, #tpu.memory_space<vmem>>, vector<8x128xf32>
    %c0_1 = arith.constant 0 : index
    %c0_2 = arith.constant 0 : index
    %1 = vector.load %arg2[%c0_1, %c0_2] : memref<48x128xf32, #tpu.memory_space<vmem>>, vector<16x8xf32>
    %c0_3 = arith.constant 0 : index
    %c127 = arith.constant 127 : index
    %2 = vector.load %arg2[%c0_3, %c127] : memref<48x128xf32, #tpu.memory_space<vmem>>, vector<16x1xf32>
    %c16 = arith.constant 16 : index
    %c0_4 = arith.constant 0 : index
    %3 = vector.load %arg2[%c16, %c0_4] : memref<48x128xf32, #tpu.memory_space<vmem>>, vector<16x16xf32>
    %c16_5 = arith.constant 16 : index
    %c127_6 = arith.constant 127 : index
    %4 = vector.load %arg2[%c16_5, %c127_6] : memref<48x128xf32, #tpu.memory_space<vmem>>, vector<16x1xf32>
    %c32 = arith.constant 32 : index
    %c0_7 = arith.constant 0 : index
    %5 = vector.load %arg2[%c32, %c0_7] : memref<48x128xf32, #tpu.memory_space<vmem>>, vector<16x1xf32>
    %c32_8 = arith.constant 32 : index
    %c1 = arith.constant 1 : index
    %6 = vector.load %arg2[%c32_8, %c1] : memref<48x128xf32, #tpu.memory_space<vmem>>, vector<1x1xf32>
    %cst = arith.constant dense<0.000000e+00> : vector<16x128xf32>
    %7 = tpu.matmul %1, %0, %cst {dimension_numbers = #tpu.dot_dimension_numbers<[1], [0], [0], [1], [0, 0, 1, 1], [], []>} : vector<16x8xf32>, vector<8x128xf32>, vector<16x128xf32> -> vector<16x128xf32>
    %8 = vector.broadcast %2 : vector<16x1xf32> to vector<16x128xf32>
    %9 = arith.addf %7, %8 : vector<16x128xf32>
    %cst_9 = arith.constant 0.000000e+00 : f32
    %10 = vector.broadcast %cst_9 : f32 to vector<16x128xf32>
    %11 = arith.maximumf %9, %10 : vector<16x128xf32>
    %cst_10 = arith.constant dense<0.000000e+00> : vector<16x128xf32>
    %12 = tpu.matmul %3, %11, %cst_10 {dimension_numbers = #tpu.dot_dimension_numbers<[1], [0], [0], [1], [0, 0, 1, 1], [], []>} : vector<16x16xf32>, vector<16x128xf32>, vector<16x128xf32> -> vector<16x128xf32>
    %13 = vector.broadcast %4 : vector<16x1xf32> to vector<16x128xf32>
    %14 = arith.addf %12, %13 : vector<16x128xf32>
    %cst_11 = arith.constant 0.000000e+00 : f32
    %15 = vector.broadcast %cst_11 : f32 to vector<16x128xf32>
    %16 = arith.maximumf %14, %15 : vector<16x128xf32>
    %17 = vector.broadcast %5 : vector<16x1xf32> to vector<16x128xf32>
    %18 = arith.mulf %17, %16 : vector<16x128xf32>
    %cst_12 = arith.constant dense<0.000000e+00> : vector<128xf32>
    %19 = vector.multi_reduction <add>, %18, %cst_12 [0] : vector<16x128xf32> to vector<128xf32>
    %20 = vector.shape_cast %19 : vector<128xf32> to vector<1x128xf32>
    %21 = vector.broadcast %6 : vector<1x1xf32> to vector<1x128xf32>
    %22 = arith.addf %20, %21 : vector<1x128xf32>
    %23 = math.tanh %22 : vector<1x128xf32>
    %cst_13 = arith.constant 2.500000e+00 : f32
    %24 = vector.broadcast %cst_13 : f32 to vector<1x128xf32>
    %25 = arith.mulf %23, %24 : vector<1x128xf32>
    %c0_14 = arith.constant 0 : index
    %c0_15 = arith.constant 0 : index
    %26 = vector.load %arg3[%c0_14, %c0_15] : memref<1x128xf32, #tpu.memory_space<vmem>>, vector<1x128xf32>
    tpu.vector_store %arg3[%c0_14, %c0_15], %25 {strides = array<i32>} : memref<1x128xf32, #tpu.memory_space<vmem>>, vector<1x128xf32>,
    return
  }
  func.func @transform_0(%arg0: i32) -> (i32, i32) {
    %c0_i32 = arith.constant 0 : i32
    %c0_i32_0 = arith.constant 0 : i32
    return %c0_i32, %arg0 : i32, i32
  }
  func.func @transform_1(%arg0: i32) -> (i32, i32) {
    %c0_i32 = arith.constant 0 : i32
    %c0_i32_0 = arith.constant 0 : i32
    %c0_i32_1 = arith.constant 0 : i32
    return %c0_i32, %c0_i32_0 : i32, i32
  }
  func.func @transform_2(%arg0: i32) -> (i32, i32) {
    %c0_i32 = arith.constant 0 : i32
    %c0_i32_0 = arith.constant 0 : i32
    return %c0_i32, %arg0 : i32, i32
  }
}

</mosaic_0001>

<llo_original>
// kernel: actor_forward.1
$region0: #{actor_forward.1}
  #allocation0 [shape = 'u32[]', space=smem, size = 0x4, offset = 0x4, fixed_abs, tag = 'smem constant byte address 0x4 - core index']
  #allocation1 [shape = 'u32[144,128]{1,0:T(1,128)}', space=vmem, size = 0x12000, scoped, tag = 'internal scratch']
  %s0 = inlined_call_operand.vmem [shape: f32[8,128], index: 0, kind: input, shape index: {}]
  %s1 = inlined_call_operand.hbm [shape: f32[48,128], index: 1, kind: input, shape index: {}]
  %s2 = inlined_call_operand.vmem [shape: f32[1,128], index: 2, kind: output, shape index: {}]
  %s3 = sld [smem:[#allocation0]]
  $region22: #{actor_forward.1} parent=0
    _
  %s5 = ssub.s32 1, %s3
  %s6 = scalar_select 0, %s5, %s3
  $region1: #{actor_forward.1} parent=0
    #allocation2 [shape = 'u8[24576]{0}', space=vmem, size = 0x6000, scoped, tag = 'input window, operand 1, single buffered']
    #allocation3 [shape = 's32[1]{0}', space=sflag, size = 0x4, scoped, tag = 'scoped memory for actor_forward.1']
    %7 = vsyncpa [#allocation3], 0
    // Predicated region
    $region2: #{actor_forward.1} parent=1 // pred_check
      _
    $region3: #{actor_forward.1} parent=1 // pred_check_branch
      %9 = sbr.rel (0) target = $region5
    $region4: #{actor_forward.1} parent=1 // pred_region
      _
    $region5: #{actor_forward.1} parent=1 // pred_fallthru
      _
    // Predicated region
    $region6: #{actor_forward.1} parent=1 // pred_check
      _
    $region7: #{actor_forward.1} parent=1 // pred_check_branch
      %11 = sbr.rel (0) target = $region9
    $region8: #{actor_forward.1} parent=1 // pred_region
      %s13 = ssub.s32 768, 768
      %14 = vsyncadd [#allocation3], %s13
      %s15 = sshll.u32 [#allocation2], 4
      %s16 = int_to_ptr.vmem [resolvable:$true] %s15
      %21 = dma.hbm_to_vmem [thread:$0]  %s1, 768, %s16, [#allocation3], 128, 128, 8
    $region9: #{actor_forward.1} parent=1 // pred_fallthru
      _
    // Predicated region
    $region10: #{actor_forward.1} parent=1 // pred_check
      _
    $region11: #{actor_forward.1} parent=1 // pred_check_branch
      %23 = sbr.rel (0) target = $region13
    $region12: #{actor_forward.1} parent=1 // pred_region
      %24 = dma.done [#allocation3], 768
    $region13: #{actor_forward.1} parent=1 // pred_fallthru
      _
    %v25 = vld [vmem:[%s0] sm:$0xff]
    %v26 = vld [vmem:[#allocation2] sm:$0xff]
    %v27 = vld [vmem:[#allocation2 + $0x8] sm:$0xff]
    %v28 = vld [vmem:[#allocation2 + $0x10] sm:$0xff]
    %v29 = vld [vmem:[#allocation2 + $0x18] sm:$0xff]
    %v30 = vld [vmem:[#allocation2 + $0x20] sm:$0xff]
    %v31 = vld [vmem:[#allocation2 + $0x28] sm:$0xff]
    %v32 = vld [vmem:[#allocation2 + $0x20] sm:$0x1]
    %34 = vset.pattern.permute.xlu0 127
    %35 = vperm.xlu0 %34, %v26
    %v36 = vpop.permute.xlu0 %35
    %39 = vset.pattern.permute.xlu0 127
    %40 = vperm.xlu0 %39, %v27
    %v41 = vpop.permute.xlu0 %40
    %vm43 = vcmask 64512
    %v44 = vsel %vm43, %v26, 0
    %v46 = vsel %vm43, %v27, 0
    %48 = vmatprep.subr.mxu0 0.0
    %49 = vmatpush1.msra.mxu0 %v25
    %50 = vmatprep.subr.mxu0 0.0
    %51 = vmatpush1.msra.mxu0 0.0
    %52 = vmatprep.subr.mxu0 0.0
    %53 = vmatpush1.msra.mxu0 0.0
    %54 = vmatprep.subr.mxu0 0.0
    %55 = vmatpush1.msra.mxu0 0.0
    %56 = vmatprep.subr.mxu0 0.0
    %57 = vmatpush1.msra.mxu0 0.0
    %58 = vmatprep.subr.mxu0 0.0
    %59 = vmatpush1.msra.mxu0 0.0
    %60 = vmatprep.subr.mxu0 0.0
    %61 = vmatpush1.msra.mxu0 0.0
    %62 = vmatprep.subr.mxu0 0.0
    %63 = vmatpush1.msra.mxu0 0.0
    %64 = vmatprep.subr.mxu0 0.0
    %65 = vmatpush1.msra.mxu0 0.0
    %66 = vmatprep.subr.mxu0 0.0
    %67 = vmatpush1.msra.mxu0 0.0
    %68 = vmatprep.subr.mxu0 0.0
    %69 = vmatpush1.msra.mxu0 0.0
    %70 = vmatprep.subr.mxu0 0.0
    %71 = vmatpush1.msra.mxu0 0.0
    %72 = vmatprep.subr.mxu0 0.0
    %73 = vmatpush1.msra.mxu0 0.0
    %74 = vmatprep.subr.mxu0 0.0
    %75 = vmatpush1.msra.mxu0 0.0
    %76 = vmatprep.subr.mxu0 0.0
    %77 = vmatpush1.msra.mxu0 0.0
    %78 = vmatprep.subr.mxu0 0.0
    %79 = vmatpush1.msra.mxu0 0.0
    %80 = vmatprep.subr.mxu0 0.0
    %81 = vmatpush1.msra.mxu0 0.0
    %82 = vmatprep.subr.mxu0 0.0
    %83 = vmatpush1.msra.mxu0 0.0
    %84 = vmatprep.subr.mxu0 0.0
    %85 = vmatpush1.msra.mxu0 0.0
    %86 = vmatprep.subr.mxu0 0.0
    %87 = vmatpush1.msra.mxu0 0.0
    %88 = vmatprep.subr.mxu0 0.0
    %89 = vmatpush1.msra.mxu0 0.0
    %90 = vmatprep.subr.mxu0 0.0
    %91 = vmatpush1.msra.mxu0 0.0
    %92 = vmatprep.subr.mxu0 0.0
    %93 = vmatpush1.msra.mxu0 0.0
    %94 = vmatprep.subr.mxu0 0.0
    %95 = vmatpush1.msra.mxu0 0.0
    %96 = vmatprep.subr.mxu0 0.0
    %97 = vmatpush1.msra.mxu0 0.0
    %98 = vmatprep.subr.mxu0 0.0
    %99 = vmatpush1.msra.mxu0 0.0
    %100 = vmatprep.subr.mxu0 0.0
    %101 = vmatpush1.msra.mxu0 0.0
    %102 = vmatprep.subr.mxu0 0.0
    %103 = vmatpush1.msra.mxu0 0.0
    %104 = vmatprep.subr.mxu0 0.0
    %105 = vmatpush1.msra.mxu0 0.0
    %106 = vmatprep.subr.mxu0 0.0
    %107 = vmatpush1.msra.mxu0 0.0
    %108 = vmatprep.subr.mxu0 0.0
    %109 = vmatpush1.msra.mxu0 0.0
    %110 = vmatprep.subr.mxu0 0.0
    %111 = vmatpush1.msra.mxu0 0.0
    %112 = vmatprep.mubr.f32.mxu0 0.0
    %113 = vmatmul.mubr.f32.gmra.mrb[0].mxu0 %v44
    %v114 = vpop.f32.mrb[0].mxu0
    %v115 = vadd.f32 %v36, %v114
    %v116 = vpop.f32.mrb[0].mxu0
    %117 = vmatprep.mubr.f32.mxu0 0.0
    %118 = vmatmul.mubr.f32.gmra.mrb[0].mxu0 %v46
    %v119 = vpop.f32.mrb[0].mxu0
    %v120 = vadd.f32 %v41, %v119
    %v121 = vpop.f32.mrb[0].mxu0
    %122 = vdwg.mxu0
    %v123 = vmax.f32 %v115, 0.0
    %v124 = vmax.f32 %v120, 0.0
    %126 = vset.pattern.permute.xlu0 127
    %127 = vperm.xlu0 %126, %v28
    %v128 = vpop.permute.xlu0 %127
    %131 = vset.pattern.permute.xlu0 127
    %132 = vperm.xlu0 %131, %v29
    %v133 = vpop.permute.xlu0 %132
    %vm135 = vcmask 130048
    %v136 = vsel %vm135, %v28, 0
    %v138 = vsel %vm135, %v29, 0
    %140 = vmatprep.subr.mxu0 0.0
    %141 = vmatpush1.msra.mxu0 %v123
    %142 = vmatprep.subr.mxu0 0.0
    %143 = vmatpush1.msra.mxu0 %v124
    %144 = vmatprep.subr.mxu0 0.0
    %145 = vmatpush1.msra.mxu0 0.0
    %146 = vmatprep.subr.mxu0 0.0
    %147 = vmatpush1.msra.mxu0 0.0
    %148 = vmatprep.subr.mxu0 0.0
    %149 = vmatpush1.msra.mxu0 0.0
    %150 = vmatprep.subr.mxu0 0.0
    %151 = vmatpush1.msra.mxu0 0.0
    %152 = vmatprep.subr.mxu0 0.0
    %153 = vmatpush1.msra.mxu0 0.0
    %154 = vmatprep.subr.mxu0 0.0
    %155 = vmatpush1.msra.mxu0 0.0
    %156 = vmatprep.subr.mxu0 0.0
    %157 = vmatpush1.msra.mxu0 0.0
    %158 = vmatprep.subr.mxu0 0.0
    %159 = vmatpush1.msra.mxu0 0.0
    %160 = vmatprep.subr.mxu0 0.0
    %161 = vmatpush1.msra.mxu0 0.0
    %162 = vmatprep.subr.mxu0 0.0
    %163 = vmatpush1.msra.mxu0 0.0
    %164 = vmatprep.subr.mxu0 0.0
    %165 = vmatpush1.msra.mxu0 0.0
    %166 = vmatprep.subr.mxu0 0.0
    %167 = vmatpush1.msra.mxu0 0.0
    %168 = vmatprep.subr.mxu0 0.0
    %169 = vmatpush1.msra.mxu0 0.0
    %170 = vmatprep.subr.mxu0 0.0
    %171 = vmatpush1.msra.mxu0 0.0
    %172 = vmatprep.subr.mxu0 0.0
    %173 = vmatpush1.msra.mxu0 0.0
    %174 = vmatprep.subr.mxu0 0.0
    %175 = vmatpush1.msra.mxu0 0.0
    %176 = vmatprep.subr.mxu0 0.0
    %177 = vmatpush1.msra.mxu0 0.0
    %178 = vmatprep.subr.mxu0 0.0
    %179 = vmatpush1.msra.mxu0 0.0
    %180 = vmatprep.subr.mxu0 0.0
    %181 = vmatpush1.msra.mxu0 0.0
    %182 = vmatprep.subr.mxu0 0.0
    %183 = vmatpush1.msra.mxu0 0.0
    %184 = vmatprep.subr.mxu0 0.0
    %185 = vmatpush1.msra.mxu0 0.0
    %186 = vmatprep.subr.mxu0 0.0
    %187 = vmatpush1.msra.mxu0 0.0
    %188 = vmatprep.subr.mxu0 0.0
    %189 = vmatpush1.msra.mxu0 0.0
    %190 = vmatprep.subr.mxu0 0.0
    %191 = vmatpush1.msra.mxu0 0.0
    %192 = vmatprep.subr.mxu0 0.0
    %193 = vmatpush1.msra.mxu0 0.0
    %194 = vmatprep.subr.mxu0 0.0
    %195 = vmatpush1.msra.mxu0 0.0
    %196 = vmatprep.subr.mxu0 0.0
    %197 = vmatpush1.msra.mxu0 0.0
    %198 = vmatprep.subr.mxu0 0.0
    %199 = vmatpush1.msra.mxu0 0.0
    %200 = vmatprep.subr.mxu0 0.0
    %201 = vmatpush1.msra.mxu0 0.0
    %202 = vmatprep.subr.mxu0 0.0
    %203 = vmatpush1.msra.mxu0 0.0
    %204 = vmatprep.mubr.f32.mxu0 0.0
    %205 = vmatmul.mubr.f32.gmra.mrb[0].mxu0 %v136
    %v206 = vpop.f32.mrb[0].mxu0
    %v207 = vadd.f32 %v128, %v206
    %v208 = vpop.f32.mrb[0].mxu0
    %209 = vmatprep.mubr.f32.mxu0 0.0
    %210 = vmatmul.mubr.f32.gmra.mrb[0].mxu0 %v138
    %v211 = vpop.f32.mrb[0].mxu0
    %v212 = vadd.f32 %v133, %v211
    %v213 = vpop.f32.mrb[0].mxu0
    %214 = vdwg.mxu0
    %v215 = vmax.f32 %v207, 0.0
    %v216 = vmax.f32 %v212, 0.0
    %218 = vset.pattern.permute.xlu0 0
    %219 = vperm.xlu0 %218, %v30
    %v220 = vpop.permute.xlu0 %219
    %223 = vset.pattern.permute.xlu0 0
    %224 = vperm.xlu0 %223, %v31
    %v225 = vpop.permute.xlu0 %224
    %v227 = vmul.f32 %v220, %v215
    %v228 = vmul.f32 %v225, %v216
    %v229 = vadd.f32 %v227, %v228
    %v230 = vrot.slane %v229, 4
    %v231 = vadd.f32 %v229, %v230
    %v232 = vrot.slane %v231, 2
    %v233 = vadd.f32 %v231, %v232
    %v234 = vrot.slane %v233, 1
    %v235 = vadd.f32 %v233, %v234
    %237 = vset.pattern.permute.xlu0 1
    %238 = vperm.xlu0 %237, %v32
    %v239 = vpop.permute.xlu0 %238
    %v241 = vadd.f32 %v235, %v239
    %v242 = vtanh.pop %v241
    %v243 = vmul.f32 %v242, 2.5
    %244 = vst [vmem:[%s2] sm:$0x1] %v243
    // Predicated region
    $region14: #{actor_forward.1} parent=1 // pred_check
      _
    $region15: #{actor_forward.1} parent=1 // pred_check_branch
      %246 = sbr.rel (0) target = $region17
    $region16: #{actor_forward.1} parent=1 // pred_region
      _
    $region17: #{actor_forward.1} parent=1 // pred_fallthru
      _
    // Predicated region
    $region18: #{actor_forward.1} parent=1 // pred_check
      _
    $region19: #{actor_forward.1} parent=1 // pred_check_branch
      %248 = sbr.rel (0) target = $region21
    $region20: #{actor_forward.1} parent=1 // pred_region
      _
    $region21: #{actor_forward.1} parent=1 // pred_fallthru
      _
    %249 = vsyncpa [#allocation3], 1

</llo_original>
